<compile_context>
chip_gen: v6e
topology: v6e:2x2x1
jax: 0.10.0
libtpu: 0.0.40
codegen_flags: <defaults>
</compile_context>

<pallas_src>
import functools

import jax
import jax.numpy as jnp
from jax.experimental import pallas as pl
from jax.experimental.pallas import tpu as pltpu


def _head_kernel(x_ref, w1_ref, b1_ref, w2_ref, b2_ref, o_ref):
    # x_ref : [TB, H]  CLS-token activations (f32 or bf16; cast to W dtype)
    # w1_ref: [H, H]   bf16, resident across the batch grid
    # b1_ref: [1, H]   f32
    # w2_ref: [H, LP]  bf16 (LP = num_labels padded to a multiple of 128)
    # b2_ref: [1, LP]  f32
    # o_ref : [TB, LP]
    # NOTE: rows of a partial final batch tile hold unclipped VMEM contents;
    # that is safe because rows are independent through both GEMMs and the
    # output DMA is clipped -- do NOT add any cross-row reduction here.
    x = x_ref[...].astype(w1_ref.dtype)                        # bf16 MXU operand
    h = jnp.dot(x, w1_ref[...], preferred_element_type=jnp.float32)
    h = jnp.tanh(h + b1_ref[...])                              # f32 bias + tanh (EUP)
    h = h.astype(w2_ref.dtype)                                 # back to bf16 for MXU
    out = jnp.dot(h, w2_ref[...], preferred_element_type=jnp.float32) + b2_ref[...]
    o_ref[...] = out.astype(o_ref.dtype)


def prepare_head_params(w_dense, b_dense, w_out, b_out, *, param_dtype=jnp.bfloat16):
    """One-time parameter prep (call at model init, NOT per step).

    Casts weights to bf16 and pads the out-projection to a lane-dense width
    LP (multiple of 128, kept at 128 for typical num_labels) so the per-step
    kernel never re-reads/re-writes the f32 weights.
    """
    H = w_dense.shape[0]
    L = w_out.shape[1]
    LP = max(128, ((L + 127) // 128) * 128)
    w1 = jnp.asarray(w_dense, dtype=param_dtype)
    b1 = jnp.asarray(b_dense, dtype=jnp.float32).reshape(1, H)
    w2 = jnp.pad(jnp.asarray(w_out), ((0, 0), (0, LP - L))).astype(param_dtype)
    b2 = jnp.pad(jnp.asarray(b_out, dtype=jnp.float32), (0, LP - L)).reshape(1, LP)
    return (w1, b1, w2, b2)


def roberta_classification_head(features, params, num_labels, *,
                                block_b=1024, out_dtype=jnp.float32,
                                return_padded=False):
    """features: [B, S, H] (f32 or bf16 -- pass bf16 straight through if the
    encoder already produces bf16; the kernel casts internally).
    params: output of prepare_head_params().
    Returns [B, num_labels] logits, or the padded [B, LP] block when
    return_padded=True (lets the consumer fuse the slice)."""
    w1, b1, w2, b2 = params
    B, S, H = features.shape
    LP = w2.shape[1]
    L = num_labels

    # Fuse the CLS slice into the BlockSpec: collapse [B, S, H] -> [B, S*H]
    # (a layout bitcast for the default row-major layout).  The CLS token
    # occupies columns [0, H) of every row, so a (tb, H) block at column-block
    # 0 DMAs exactly features[:, 0, :] -- no extra HBM round trip.
    if H % 128 == 0:
        x2d = features.reshape(B, S * H)
    else:
        # Lane-unaligned H: fall back to a plain-JAX slice (block == full dims).
        x2d = features[:, 0, :]

    # Batch tile: as large as possible (weights resident; fewer grid steps
    # amortize the fixed per-step overhead), but split into >=2 steps for
    # large B so the "parallel" axis actually shards across v7x's two TCs.
    tb = min(block_b, B)
    if B >= 512:
        half = -(-B // 2)              # cdiv(B, 2)
        half = -(-half // 8) * 8       # round up to sublane multiple
        tb = min(tb, half)
    if tb != B and tb % 8 != 0:
        tb = max(8, (tb // 8) * 8)     # keep partial blocks sublane-aligned
    grid = (pl.cdiv(B, tb),)

    # TODO(synk): on v7x with H >= 1024, single-buffer the resident weight
    # BlockSpecs (pipeline_mode=pl.Buffered(1)) instead of shrinking tb.
    out = pl.pallas_call(
        _head_kernel,
        out_shape=jax.ShapeDtypeStruct((B, LP), out_dtype),
        grid=grid,
        in_specs=[
            pl.BlockSpec((tb, H), lambda i: (i, 0)),     # CLS activations tile
            pl.BlockSpec((H, H), lambda i: (0, 0)),      # W1 (resident)
            pl.BlockSpec((1, H), lambda i: (0, 0)),      # b1
            pl.BlockSpec((H, LP), lambda i: (0, 0)),     # W2 padded (resident)
            pl.BlockSpec((1, LP), lambda i: (0, 0)),     # b2 padded
        ],
        out_specs=pl.BlockSpec((tb, LP), lambda i: (i, 0)),
        compiler_params=pltpu.CompilerParams(
            dimension_semantics=("parallel",),
            vmem_limit_bytes=32 * 1024 * 1024,
        ),
    )(x2d, w1, b1, w2, b2)

    if return_padded:
        return out
    return out[:, :L]


def _reference(features, w_dense, b_dense, w_out, b_out, param_dtype=jnp.bfloat16):
    # Mirrors the kernel's quantization: bf16 MXU operands, f32 accumulation.
    x = features[:, 0, :].astype(param_dtype)
    h = jnp.dot(x, w_dense.astype(param_dtype), preferred_element_type=jnp.float32)
    h = jnp.tanh(h + b_dense.astype(jnp.float32))
    out = jnp.dot(h.astype(param_dtype), w_out.astype(param_dtype),
                  preferred_element_type=jnp.float32) + b_out.astype(jnp.float32)
    return out


if __name__ == "__main__":
    # Small config: batch=2, seq=8, hidden=128 (lane-aligned), num_labels=4.
    B, S, H, L = 2, 8, 128, 4
    key = jax.random.PRNGKey(0)
    k_f, k_w1, k_b1, k_w2, k_b2 = jax.random.split(key, 5)

    features = jax.random.normal(k_f, (B, S, H), dtype=jnp.float32)
    # Deterministic "init" of the module's parameters ([in, out] layout).
    w_dense = jax.random.normal(k_w1, (H, H), dtype=jnp.float32) * 0.02
    b_dense = jax.random.normal(k_b1, (H,), dtype=jnp.float32) * 0.02
    w_out = jax.random.normal(k_w2, (H, L), dtype=jnp.float32) * 0.02
    b_out = jax.random.normal(k_b2, (L,), dtype=jnp.float32) * 0.02

    # One-time prep (model init); the per-step jit only sees bf16/padded params.
    params = prepare_head_params(w_dense, b_dense, w_out, b_out)

    head = jax.jit(functools.partial(roberta_classification_head, num_labels=L))
    logits = jax.block_until_ready(head(features, params))

    ref = _reference(features, w_dense, b_dense, w_out, b_out)
    assert logits.shape == (B, L)
    assert jnp.allclose(logits, ref, atol=2e-3, rtol=2e-3), "mismatch vs reference"

    # bf16 features path (encoder already bf16): no wrapper-side upcast needed.
    logits_bf16_in = jax.block_until_ready(head(features.astype(jnp.bfloat16), params))
    assert jnp.allclose(logits_bf16_in, ref, atol=2e-3, rtol=2e-3), "bf16-input mismatch"

    print("KERNEL_OK")
</pallas_src>

<mosaic_0001>
module attributes {stable_mosaic.version = 11 : i64} {
  func.func @_head_kernel(%arg0: i32, %arg1: memref<2x128xf32, #tpu.memory_space<vmem>>, %arg2: memref<128x128xbf16, #tpu.memory_space<vmem>>, %arg3: memref<1x128xf32, #tpu.memory_space<vmem>>, %arg4: memref<128x128xbf16, #tpu.memory_space<vmem>>, %arg5: memref<1x128xf32, #tpu.memory_space<vmem>>, %arg6: memref<2x128xf32, #tpu.memory_space<vmem>>) attributes {dimension_semantics = [#tpu.dimension_semantics<parallel>], iteration_bounds = array<i64: 1>, scalar_prefetch = 0 : i64, scratch_operands = 0 : i64, tpu.core_type = #tpu.core_type<tc>, window_params = [{transform_indices = @transform_0, window_bounds = array<i64: 2, 128>}, {pipeline_mode = #tpu.pipeline_mode<synchronous>, transform_indices = @transform_1, window_bounds = array<i64: 128, 128>}, {pipeline_mode = #tpu.pipeline_mode<synchronous>, transform_indices = @transform_2, window_bounds = array<i64: 1, 128>}, {pipeline_mode = #tpu.pipeline_mode<synchronous>, transform_indices = @transform_3, window_bounds = array<i64: 128, 128>}, {pipeline_mode = #tpu.pipeline_mode<synchronous>, transform_indices = @transform_4, window_bounds = array<i64: 1, 128>}, {transform_indices = @transform_5, window_bounds = array<i64: 2, 128>}]} {
    %c0 = arith.constant 0 : index
    %c0_0 = arith.constant 0 : index
    %0 = vector.load %arg1[%c0, %c0_0] : memref<2x128xf32, #tpu.memory_space<vmem>>, vector<2x128xf32>
    %1 = arith.truncf %0 : vector<2x128xf32> to vector<2x128xbf16>
    %c0_1 = arith.constant 0 : index
    %c0_2 = arith.constant 0 : index
    %2 = vector.load %arg2[%c0_1, %c0_2] : memref<128x128xbf16, #tpu.memory_space<vmem>>, vector<128x128xbf16>
    %cst = arith.constant dense<0.000000e+00> : vector<2x128xf32>
    %3 = tpu.matmul %1, %2, %cst {dimension_numbers = #tpu.dot_dimension_numbers<[1], [0], [0], [1], [0, 0, 1, 1], [], []>} : vector<2x128xbf16>, vector<128x128xbf16>, vector<2x128xf32> -> vector<2x128xf32>
    %c0_3 = arith.constant 0 : index
    %c0_4 = arith.constant 0 : index
    %4 = vector.load %arg3[%c0_3, %c0_4] : memref<1x128xf32, #tpu.memory_space<vmem>>, vector<1x128xf32>
    %5 = vector.broadcast %4 : vector<1x128xf32> to vector<2x128xf32>
    %6 = arith.addf %3, %5 : vector<2x128xf32>
    %7 = math.tanh %6 : vector<2x128xf32>
    %8 = arith.truncf %7 : vector<2x128xf32> to vector<2x128xbf16>
    %c0_5 = arith.constant 0 : index
    %c0_6 = arith.constant 0 : index
    %9 = vector.load %arg4[%c0_5, %c0_6] : memref<128x128xbf16, #tpu.memory_space<vmem>>, vector<128x128xbf16>
    %cst_7 = arith.constant dense<0.000000e+00> : vector<2x128xf32>
    %10 = tpu.matmul %8, %9, %cst_7 {dimension_numbers = #tpu.dot_dimension_numbers<[1], [0], [0], [1], [0, 0, 1, 1], [], []>} : vector<2x128xbf16>, vector<128x128xbf16>, vector<2x128xf32> -> vector<2x128xf32>
    %c0_8 = arith.constant 0 : index
    %c0_9 = arith.constant 0 : index
    %11 = vector.load %arg5[%c0_8, %c0_9] : memref<1x128xf32, #tpu.memory_space<vmem>>, vector<1x128xf32>
    %12 = vector.broadcast %11 : vector<1x128xf32> to vector<2x128xf32>
    %13 = arith.addf %10, %12 : vector<2x128xf32>
    %c0_10 = arith.constant 0 : index
    %c0_11 = arith.constant 0 : index
    %14 = vector.load %arg6[%c0_10, %c0_11] : memref<2x128xf32, #tpu.memory_space<vmem>>, vector<2x128xf32>
    tpu.vector_store %arg6[%c0_10, %c0_11], %13 {strides = array<i32>} : memref<2x128xf32, #tpu.memory_space<vmem>>, vector<2x128xf32>,
    return
  }
  func.func @transform_0(%arg0: i32) -> (i32, i32) {
    %c0_i32 = arith.constant 0 : i32
    %c0_i32_0 = arith.constant 0 : i32
    return %arg0, %c0_i32 : i32, i32
  }
  func.func @transform_1(%arg0: i32) -> (i32, i32) {
    %c0_i32 = arith.constant 0 : i32
    %c0_i32_0 = arith.constant 0 : i32
    %c0_i32_1 = arith.constant 0 : i32
    return %c0_i32, %c0_i32_0 : i32, i32
  }
  func.func @transform_2(%arg0: i32) -> (i32, i32) {
    %c0_i32 = arith.constant 0 : i32
    %c0_i32_0 = arith.constant 0 : i32
    %c0_i32_1 = arith.constant 0 : i32
    return %c0_i32, %c0_i32_0 : i32, i32
  }
  func.func @transform_3(%arg0: i32) -> (i32, i32) {
    %c0_i32 = arith.constant 0 : i32
    %c0_i32_0 = arith.constant 0 : i32
    %c0_i32_1 = arith.constant 0 : i32
    return %c0_i32, %c0_i32_0 : i32, i32
  }
  func.func @transform_4(%arg0: i32) -> (i32, i32) {
    %c0_i32 = arith.constant 0 : i32
    %c0_i32_0 = arith.constant 0 : i32
    %c0_i32_1 = arith.constant 0 : i32
    return %c0_i32, %c0_i32_0 : i32, i32
  }
  func.func @transform_5(%arg0: i32) -> (i32, i32) {
    %c0_i32 = arith.constant 0 : i32
    %c0_i32_0 = arith.constant 0 : i32
    return %arg0, %c0_i32 : i32, i32
  }
}

</mosaic_0001>

<llo_original>
// kernel: roberta_classification_head.1
$region0: #{roberta_classification_head.1}
  #allocation0 [shape = 'u32[]', space=smem, size = 0x4, offset = 0x4, fixed_abs, tag = 'smem constant byte address 0x4 - core index']
  #allocation1 [shape = 'u32[144,128]{1,0:T(1,128)}', space=vmem, size = 0x12000, scoped, tag = 'internal scratch']
  %s0 = inlined_call_operand.vmem [shape: f32[2,1024], index: 0, kind: input, shape index: {}]
  %s1 = inlined_call_operand.hbm [shape: bf16[128,128], index: 1, kind: input, shape index: {}]
  %s2 = inlined_call_operand.vmem [shape: f32[1,128], index: 2, kind: input, shape index: {}]
  %s3 = inlined_call_operand.hbm [shape: bf16[128,128], index: 3, kind: input, shape index: {}]
  %s4 = inlined_call_operand.vmem [shape: f32[1,128], index: 4, kind: input, shape index: {}]
  %s5 = inlined_call_operand.hbm [shape: f32[2,128], index: 5, kind: output, shape index: {}]
  %s6 = sld [smem:[#allocation0]]
  $region38: #{roberta_classification_head.1} parent=0
    _
  %s8 = ssub.s32 1, %s6
  %s9 = scalar_select 0, %s8, %s6
  $region1: #{roberta_classification_head.1} parent=0
    #allocation2 [shape = 'u8[32768]{0}', space=vmem, size = 0x8000, scoped, tag = 'input window, operand 1, single buffered']
    #allocation3 [shape = 's32[1]{0}', space=sflag, size = 0x4, scoped, tag = 'scoped memory for roberta_classification_head.1']
    #allocation4 [shape = 's32[1]{0}', space=sflag, size = 0x4, scoped, tag = 'scoped memory for roberta_classification_head.1']
    #allocation5 [shape = 'u8[32768]{0}', space=vmem, size = 0x8000, scoped, tag = 'input window, operand 3, single buffered']
    #allocation6 [shape = 's32[1]{0}', space=sflag, size = 0x4, scoped, tag = 'scoped memory for roberta_classification_head.1']
    #allocation7 [shape = 'u8[1024]{0}', space=vmem, size = 0x400, scoped, tag = 'output window, operand 0, single buffered']
    %10 = vsyncpa [#allocation3], 0
    %11 = vsyncpa [#allocation6], 0
    %12 = vsyncpa [#allocation4], 0
    // Predicated region
    $region2: #{roberta_classification_head.1} parent=1 // pred_check
      _
    $region3: #{roberta_classification_head.1} parent=1 // pred_check_branch
      %14 = sbr.rel (0) target = $region5
    $region4: #{roberta_classification_head.1} parent=1 // pred_region
      _
    $region5: #{roberta_classification_head.1} parent=1 // pred_fallthru
      _
    // Predicated region
    $region6: #{roberta_classification_head.1} parent=1 // pred_check
      _
    $region7: #{roberta_classification_head.1} parent=1 // pred_check_branch
      %16 = sbr.rel (0) target = $region9
    $region8: #{roberta_classification_head.1} parent=1 // pred_region
      %s18 = ssub.s32 1024, 1024
      %19 = vsyncadd [#allocation3], %s18
      %s20 = sshll.u32 [#allocation2], 4
      %s21 = int_to_ptr.vmem [resolvable:$true] %s20
      %26 = dma.hbm_to_vmem [thread:$0]  %s1, 1024, %s21, [#allocation3], 64, 64, 4
    $region9: #{roberta_classification_head.1} parent=1 // pred_fallthru
      _
    // Predicated region
    $region10: #{roberta_classification_head.1} parent=1 // pred_check
      _
    $region11: #{roberta_classification_head.1} parent=1 // pred_check_branch
      %28 = sbr.rel (0) target = $region13
    $region12: #{roberta_classification_head.1} parent=1 // pred_region
      _
    $region13: #{roberta_classification_head.1} parent=1 // pred_fallthru
      _
    // Predicated region
    $region14: #{roberta_classification_head.1} parent=1 // pred_check
      _
    $region15: #{roberta_classification_head.1} parent=1 // pred_check_branch
      %30 = sbr.rel (0) target = $region17
    $region16: #{roberta_classification_head.1} parent=1 // pred_region
      %s32 = ssub.s32 1024, 1024
      %33 = vsyncadd [#allocation6], %s32
      %s34 = sshll.u32 [#allocation5], 4
      %s35 = int_to_ptr.vmem [resolvable:$true] %s34
      %40 = dma.hbm_to_vmem [thread:$0]  %s3, 1024, %s35, [#allocation6], 64, 64, 4
    $region17: #{roberta_classification_head.1} parent=1 // pred_fallthru
      _
    // Predicated region
    $region18: #{roberta_classification_head.1} parent=1 // pred_check
      _
    $region19: #{roberta_classification_head.1} parent=1 // pred_check_branch
      %42 = sbr.rel (0) target = $region21
    $region20: #{roberta_classification_head.1} parent=1 // pred_region
      _
    $region21: #{roberta_classification_head.1} parent=1 // pred_fallthru
      _
    // Predicated region
    $region22: #{roberta_classification_head.1} parent=1 // pred_check
      _
    $region23: #{roberta_classification_head.1} parent=1 // pred_check_branch
      %44 = sbr.rel (0) target = $region25
    $region24: #{roberta_classification_head.1} parent=1 // pred_region
      %45 = dma.done [#allocation3], 1024
    $region25: #{roberta_classification_head.1} parent=1 // pred_fallthru
      _
    // Predicated region
    $region26: #{roberta_classification_head.1} parent=1 // pred_check
      _
    $region27: #{roberta_classification_head.1} parent=1 // pred_check_branch
      %47 = sbr.rel (0) target = $region29
    $region28: #{roberta_classification_head.1} parent=1 // pred_region
      %48 = dma.done [#allocation6], 1024
    $region29: #{roberta_classification_head.1} parent=1 // pred_fallthru
      _
    %v50 = vld [vmem:[%s0] sm:$0x3]
    %v51 = vpack.c.bf16 %v50, %v50
    %v52 = vld [vmem:[#allocation2] sm:$0xf]
    %v53 = vld [vmem:[#allocation2 + $0x4] sm:$0xf]
    %v54 = vld [vmem:[#allocation2 + $0x8] sm:$0xf]
    %v55 = vld [vmem:[#allocation2 + $0xc] sm:$0xf]
    %v56 = vld [vmem:[#allocation2 + $0x10] sm:$0xf]
    %v57 = vld [vmem:[#allocation2 + $0x14] sm:$0xf]
    %v58 = vld [vmem:[#allocation2 + $0x18] sm:$0xf]
    %v59 = vld [vmem:[#allocation2 + $0x1c] sm:$0xf]
    %v60 = vld [vmem:[#allocation2 + $0x20] sm:$0xf]
    %v61 = vld [vmem:[#allocation2 + $0x24] sm:$0xf]
    %v62 = vld [vmem:[#allocation2 + $0x28] sm:$0xf]
    %v63 = vld [vmem:[#allocation2 + $0x2c] sm:$0xf]
    %v64 = vld [vmem:[#allocation2 + $0x30] sm:$0xf]
    %v65 = vld [vmem:[#allocation2 + $0x34] sm:$0xf]
    %v66 = vld [vmem:[#allocation2 + $0x38] sm:$0xf]
    %v67 = vld [vmem:[#allocation2 + $0x3c] sm:$0xf]
    %v68 = vld [vmem:[%s2] sm:$0x1]
    %v70 = vlaneseq
    %v71 = vshrl.u32 %v70, 7
    %v72 = vsub.s32 0, %v71
    %v73 = vrot.slane %v68, %v72
    %v91 = vunpack.c.l.b16 %v52
    %v92 = vunpack.c.l.b16 %v53
    %v93 = vunpack.c.l.b16 %v54
    %v94 = vunpack.c.l.b16 %v55
    %v95 = vunpack.c.l.b16 %v56
    %v96 = vunpack.c.l.b16 %v57
    %v97 = vunpack.c.l.b16 %v58
    %v98 = vunpack.c.l.b16 %v59
    %v99 = vunpack.c.l.b16 %v60
    %v100 = vunpack.c.l.b16 %v61
    %v101 = vunpack.c.l.b16 %v62
    %v102 = vunpack.c.l.b16 %v63
    %v103 = vunpack.c.l.b16 %v64
    %v104 = vunpack.c.l.b16 %v65
    %v105 = vunpack.c.l.b16 %v66
    %v106 = vunpack.c.l.b16 %v67
    %v107 = vpack.c.b16 %v92, %v91
    %v108 = vpack.c.b16 %v94, %v93
    %v109 = vpack.c.b16 %v96, %v95
    %v110 = vpack.c.b16 %v98, %v97
    %v111 = vpack.c.b16 %v100, %v99
    %v112 = vpack.c.b16 %v102, %v101
    %v113 = vpack.c.b16 %v104, %v103
    %v114 = vpack.c.b16 %v106, %v105
    %123 = vmatprep.subr.bf16.mxu0 0
    %124 = vmatpush1.bf16.msra.mxu0 %v114
    %125 = vmatprep.subr.bf16.mxu0 0
    %126 = vmatpush1.bf16.msra.mxu0 %v113
    %127 = vmatprep.subr.bf16.mxu0 0
    %128 = vmatpush1.bf16.msra.mxu0 %v112
    %129 = vmatprep.subr.bf16.mxu0 0
    %130 = vmatpush1.bf16.msra.mxu0 %v111
    %131 = vmatprep.subr.bf16.mxu0 0
    %132 = vmatpush1.bf16.msra.mxu0 %v110
    %133 = vmatprep.subr.bf16.mxu0 0
    %134 = vmatpush1.bf16.msra.mxu0 %v109
    %135 = vmatprep.subr.bf16.mxu0 0
    %136 = vmatpush1.bf16.msra.mxu0 %v108
    %137 = vmatprep.subr.bf16.mxu0 0
    %138 = vmatpush1.bf16.msra.mxu0 %v107
    %139 = vmatprep.subr.bf16.mxu0 0
    %140 = vmatpush2.bf16.msra.mxu0 0
    %141 = vmatprep.subr.bf16.mxu0 0
    %142 = vmatpush2.bf16.msra.mxu0 0
    %143 = vmatprep.subr.bf16.mxu0 0
    %144 = vmatpush2.bf16.msra.mxu0 0
    %145 = vmatprep.subr.bf16.mxu0 0
    %146 = vmatpush2.bf16.msra.mxu0 0
    %147 = vmatprep.subr.bf16.mxu0 0
    %148 = vmatpush2.bf16.msra.mxu0 0
    %149 = vmatprep.subr.bf16.mxu0 0
    %150 = vmatpush2.bf16.msra.mxu0 0
    %151 = vmatprep.subr.bf16.mxu0 0
    %152 = vmatpush2.bf16.msra.mxu0 0
    %153 = vmatprep.subr.bf16.mxu0 0
    %154 = vmatpush2.bf16.msra.mxu0 0
    %155 = vmatprep.mubr.bf16.mxu0 0
    %156 = vmatmul.mubr.bf16.gmra.mxu0 %v51
    %v157 = vpop.f32.mrf.mxu0
    %v158 = vadd.f32 %v73, %v157
    %v159 = vpop.f32.mrf.mxu0
    %v160 = vpop.f32.mrf.mxu0
    %v161 = vpop.f32.mrf.mxu0
    %162 = vdwg.mxu0
    %v163 = vtanh.pop %v158
    %v164 = vpack.c.bf16 %v163, %v163
    %v165 = vld [vmem:[#allocation5] sm:$0xf]
    %v166 = vld [vmem:[#allocation5 + $0x4] sm:$0xf]
    %v167 = vld [vmem:[#allocation5 + $0x8] sm:$0xf]
    %v168 = vld [vmem:[#allocation5 + $0xc] sm:$0xf]
    %v169 = vld [vmem:[#allocation5 + $0x10] sm:$0xf]
    %v170 = vld [vmem:[#allocation5 + $0x14] sm:$0xf]
    %v171 = vld [vmem:[#allocation5 + $0x18] sm:$0xf]
    %v172 = vld [vmem:[#allocation5 + $0x1c] sm:$0xf]
    %v173 = vld [vmem:[#allocation5 + $0x20] sm:$0xf]
    %v174 = vld [vmem:[#allocation5 + $0x24] sm:$0xf]
    %v175 = vld [vmem:[#allocation5 + $0x28] sm:$0xf]
    %v176 = vld [vmem:[#allocation5 + $0x2c] sm:$0xf]
    %v177 = vld [vmem:[#allocation5 + $0x30] sm:$0xf]
    %v178 = vld [vmem:[#allocation5 + $0x34] sm:$0xf]
    %v179 = vld [vmem:[#allocation5 + $0x38] sm:$0xf]
    %v180 = vld [vmem:[#allocation5 + $0x3c] sm:$0xf]
    %v181 = vld [vmem:[%s4] sm:$0x1]
    %v183 = vlaneseq
    %v184 = vshrl.u32 %v183, 7
    %v185 = vsub.s32 0, %v184
    %v186 = vrot.slane %v181, %v185
    %v204 = vunpack.c.l.b16 %v165
    %v205 = vunpack.c.l.b16 %v166
    %v206 = vunpack.c.l.b16 %v167
    %v207 = vunpack.c.l.b16 %v168
    %v208 = vunpack.c.l.b16 %v169
    %v209 = vunpack.c.l.b16 %v170
    %v210 = vunpack.c.l.b16 %v171
    %v211 = vunpack.c.l.b16 %v172
    %v212 = vunpack.c.l.b16 %v173
    %v213 = vunpack.c.l.b16 %v174
    %v214 = vunpack.c.l.b16 %v175
    %v215 = vunpack.c.l.b16 %v176
    %v216 = vunpack.c.l.b16 %v177
    %v217 = vunpack.c.l.b16 %v178
    %v218 = vunpack.c.l.b16 %v179
    %v219 = vunpack.c.l.b16 %v180
    %v220 = vpack.c.b16 %v205, %v204
    %v221 = vpack.c.b16 %v207, %v206
    %v222 = vpack.c.b16 %v209, %v208
    %v223 = vpack.c.b16 %v211, %v210
    %v224 = vpack.c.b16 %v213, %v212
    %v225 = vpack.c.b16 %v215, %v214
    %v226 = vpack.c.b16 %v217, %v216
    %v227 = vpack.c.b16 %v219, %v218
    %236 = vmatprep.subr.bf16.mxu0 0
    %237 = vmatpush1.bf16.msra.mxu0 %v227
    %238 = vmatprep.subr.bf16.mxu0 0
    %239 = vmatpush1.bf16.msra.mxu0 %v226
    %240 = vmatprep.subr.bf16.mxu0 0
    %241 = vmatpush1.bf16.msra.mxu0 %v225
    %242 = vmatprep.subr.bf16.mxu0 0
    %243 = vmatpush1.bf16.msra.mxu0 %v224
    %244 = vmatprep.subr.bf16.mxu0 0
    %245 = vmatpush1.bf16.msra.mxu0 %v223
    %246 = vmatprep.subr.bf16.mxu0 0
    %247 = vmatpush1.bf16.msra.mxu0 %v222
    %248 = vmatprep.subr.bf16.mxu0 0
    %249 = vmatpush1.bf16.msra.mxu0 %v221
    %250 = vmatprep.subr.bf16.mxu0 0
    %251 = vmatpush1.bf16.msra.mxu0 %v220
    %252 = vmatprep.subr.bf16.mxu0 0
    %253 = vmatpush2.bf16.msra.mxu0 0
    %254 = vmatprep.subr.bf16.mxu0 0
    %255 = vmatpush2.bf16.msra.mxu0 0
    %256 = vmatprep.subr.bf16.mxu0 0
    %257 = vmatpush2.bf16.msra.mxu0 0
    %258 = vmatprep.subr.bf16.mxu0 0
    %259 = vmatpush2.bf16.msra.mxu0 0
    %260 = vmatprep.subr.bf16.mxu0 0
    %261 = vmatpush2.bf16.msra.mxu0 0
    %262 = vmatprep.subr.bf16.mxu0 0
    %263 = vmatpush2.bf16.msra.mxu0 0
    %264 = vmatprep.subr.bf16.mxu0 0
    %265 = vmatpush2.bf16.msra.mxu0 0
    %266 = vmatprep.subr.bf16.mxu0 0
    %267 = vmatpush2.bf16.msra.mxu0 0
    %268 = vmatprep.mubr.bf16.mxu0 0
    %269 = vmatmul.mubr.bf16.gmra.mxu0 %v164
    %v270 = vpop.f32.mrf.mxu0
    %v271 = vadd.f32 %v186, %v270
    %v272 = vpop.f32.mrf.mxu0
    %v273 = vpop.f32.mrf.mxu0
    %v274 = vpop.f32.mrf.mxu0
    %275 = vdwg.mxu0
    %276 = vst [vmem:[#allocation7] sm:$0x3] %v271
    // Predicated region
    $region30: #{roberta_classification_head.1} parent=1 // pred_check
      _
    $region31: #{roberta_classification_head.1} parent=1 // pred_check_branch
      %278 = sbr.rel (0) target = $region33
    $region32: #{roberta_classification_head.1} parent=1 // pred_region
      %s280 = ssub.s32 32, 32
      %281 = vsyncadd [#allocation4], %s280
      %s283 = sshll.u32 [#allocation7], 4
      %s284 = int_to_ptr.vmem [resolvable:$true] %s283
      %286 = dma.vmem_to_hbm [thread:$0]  %s284, 32, %s5, [#allocation4]
    $region33: #{roberta_classification_head.1} parent=1 // pred_fallthru
      _
    // Predicated region
    $region34: #{roberta_classification_head.1} parent=1 // pred_check
      _
    $region35: #{roberta_classification_head.1} parent=1 // pred_check_branch
      %288 = sbr.rel (0) target = $region37
    $region36: #{roberta_classification_head.1} parent=1 // pred_region
      %289 = dma.done [#allocation4], 32
    $region37: #{roberta_classification_head.1} parent=1 // pred_fallthru
      _
    %290 = vsyncpa [#allocation3], 1
    %291 = vsyncpa [#allocation6], 1
    %292 = vsyncpa [#allocation4], 1

</llo_original>
